<compile_context>
chip_gen: v7x
topology: tpu7x:2x2x1
jax: 0.10.0
libtpu: 0.0.40
codegen_flags: <defaults>
</compile_context>

<pallas_src>
import jax
import jax.numpy as jnp
from jax.experimental import pallas as pl
from jax.experimental.pallas import tpu as pltpu

_LANE = 128
# 32768-wide bf16/f32 slabs, double buffered, stay under v5e's 16 MiB default
# scoped-VMEM limit; larger tiles would need vmem_limit_bytes.
_MAX_TB = 32768


def _round_up(x, m):
    return ((x + m - 1) // m) * m


def _mf_kernel(u_ref, i_ref, b_ref, o_ref):
    # u_ref, i_ref: (D, TB)   b_ref, o_ref: (1, TB)
    # Upcast to f32 before the multiply: safe on v5e (no bf16 VALU) and free
    # filler on v6e/v7x while the op is HBM-bound.
    u = u_ref[...].astype(jnp.float32)
    it = i_ref[...].astype(jnp.float32)
    # Elementwise product on the VPU, sublane (axis 0) reduction on the XLU.
    dot = jnp.sum(u * it, axis=0, keepdims=True)               # (1, TB)
    o_ref[...] = (dot + b_ref[...].astype(jnp.float32)).astype(o_ref.dtype)


def mf_forward(user_emb_table, item_emb_table, item_bias_table,
               user_ids, item_ids, *, batch_tile=16384,
               slab_dtype=jnp.float32):
    """MFNet predictions for (user_ids, item_ids) pairs.  Returns (B,) f32."""
    B = int(user_ids.shape[0])
    D = int(user_emb_table.shape[1])

    # ---- batch-tile selection -------------------------------------------
    tb = max(_LANE, (min(int(batch_tile), _MAX_TB) // _LANE) * _LANE)
    tb = min(tb, _round_up(B, _LANE))
    # Guarantee >= 2 grid steps (when splittable) so the "parallel" axis
    # actually shards across v7x's two TensorCores.
    if _round_up(B, tb) == tb and tb >= 2 * _LANE:
        tb = _round_up(tb // 2, _LANE)
    b_pad = _round_up(B, tb)
    grid = (b_pad // tb,)

    # ---- glue: pad ids (not slabs), row-gather, then cast+transpose ------
    pad = b_pad - B
    if pad:
        # Pad with a *valid* index (0); the padded lanes are sliced off below.
        user_ids = jnp.pad(user_ids, (0, pad))
        item_ids = jnp.pad(item_ids, (0, pad))

    # Row gather first: O(B*D) traffic.  Cast + transpose only the gathered
    # block so the kernel sees lane-dense (D, B) slabs.
    u = jnp.take(user_emb_table, user_ids, axis=0).astype(slab_dtype).T  # (D, b_pad)
    i = jnp.take(item_emb_table, item_ids, axis=0).astype(slab_dtype).T  # (D, b_pad)
    bias = jnp.take(item_bias_table[:, 0], item_ids, axis=0)             # (b_pad,)
    bias = bias.reshape(1, b_pad).astype(jnp.float32)

    out = pl.pallas_call(
        _mf_kernel,
        out_shape=jax.ShapeDtypeStruct((1, b_pad), jnp.float32),
        grid_spec=pltpu.PrefetchScalarGridSpec(
            num_scalar_prefetch=0,
            grid=grid,
            in_specs=[
                pl.BlockSpec((D, tb), lambda t: (0, t)),
                pl.BlockSpec((D, tb), lambda t: (0, t)),
                pl.BlockSpec((1, tb), lambda t: (0, t)),
            ],
            out_specs=pl.BlockSpec((1, tb), lambda t: (0, t)),
        ),
        compiler_params=pltpu.CompilerParams(
            # Batch axis is embarrassingly parallel -> megacore sharding on
            # v7x; no-op on single-TC v5e/v6e.
            dimension_semantics=("parallel",)),
    )(u, i, bias)

    return out[0, :B]                                           # (B,)


def mf_reference(user_emb_table, item_emb_table, item_bias_table,
                 user_ids, item_ids, *, slab_dtype=jnp.float32):
    """Fused-XLA baseline (also applies the same optional storage rounding)."""
    u = jnp.take(user_emb_table, user_ids, axis=0).astype(slab_dtype)
    i = jnp.take(item_emb_table, item_ids, axis=0).astype(slab_dtype)
    b = jnp.take(item_bias_table, item_ids, axis=0)[:, 0]
    return jnp.sum(u.astype(jnp.float32) * i.astype(jnp.float32), axis=1) + b


if __name__ == "__main__":
    key = jax.random.PRNGKey(0)

    def make_case(n_users, n_items, embedding_dim, batch, key):
        k_u, k_i, k_b, k_uid, k_iid = jax.random.split(key, 5)
        # ScaledEmbedding: normal(0, 1/embedding_dim); ZeroEmbedding: zeros.
        user_emb = (jax.random.normal(k_u, (n_users, embedding_dim),
                                      dtype=jnp.float32) / embedding_dim)
        item_emb = (jax.random.normal(k_i, (n_items, embedding_dim),
                                      dtype=jnp.float32) / embedding_dim)
        item_bias = jnp.zeros((n_items, 1), dtype=jnp.float32)
        uid = jax.random.randint(k_uid, (batch,), 0, n_users, dtype=jnp.int32)
        iid = jax.random.randint(k_iid, (batch,), 0, n_items, dtype=jnp.int32)
        return user_emb, item_emb, item_bias, uid, iid

    # --- small case (module-default shapes): batch=8, D=32 ----------------
    ue, ie, ib, uid, iid = make_case(16, 20, 32, 8, key)
    out = mf_forward(ue, ie, ib, uid, iid)                    # f32 slabs (exact)
    out = jax.block_until_ready(out)
    assert out.shape == (8,)
    ref = mf_reference(ue, ie, ib, uid, iid)
    assert jnp.allclose(out, ref, atol=1e-6, rtol=1e-5), (out, ref)

    # bf16-slab option (halved slab HBM traffic; looser tolerance).
    out_bf16 = mf_forward(ue, ie, ib, uid, iid, slab_dtype=jnp.bfloat16)
    out_bf16 = jax.block_until_ready(out_bf16)
    ref_bf16 = mf_reference(ue, ie, ib, uid, iid, slab_dtype=jnp.bfloat16)
    assert jnp.allclose(out_bf16, ref_bf16, atol=1e-5, rtol=1e-5)
    assert jnp.allclose(out_bf16, ref, atol=1e-3, rtol=2e-2)

    # --- slightly larger case: exercises id-padding + >=2-step grid -------
    ue2, ie2, ib2, uid2, iid2 = make_case(64, 80, 32, 300, jax.random.PRNGKey(1))
    out2 = jax.block_until_ready(mf_forward(ue2, ie2, ib2, uid2, iid2))
    ref2 = mf_reference(ue2, ie2, ib2, uid2, iid2)
    assert out2.shape == (300,)
    assert jnp.allclose(out2, ref2, atol=1e-6, rtol=1e-5), (out2, ref2)

    print("KERNEL_OK")
</pallas_src>

<mosaic_0001>
module attributes {stable_mosaic.version = 11 : i64} {
  func.func @_mf_kernel(%arg0: i32, %arg1: memref<32x128xf32, #tpu.memory_space<vmem>>, %arg2: memref<32x128xf32, #tpu.memory_space<vmem>>, %arg3: memref<1x128xf32, #tpu.memory_space<vmem>>, %arg4: memref<1x128xf32, #tpu.memory_space<vmem>>) attributes {dimension_semantics = [#tpu.dimension_semantics<parallel>], iteration_bounds = array<i64: 1>, scalar_prefetch = 0 : i64, scratch_operands = 0 : i64, tpu.core_type = #tpu.core_type<tc>, window_params = [{transform_indices = @transform_0, window_bounds = array<i64: 32, 128>}, {transform_indices = @transform_1, window_bounds = array<i64: 32, 128>}, {transform_indices = @transform_2, window_bounds = array<i64: 1, 128>}, {transform_indices = @transform_3, window_bounds = array<i64: 1, 128>}]} {
    %c0 = arith.constant 0 : index
    %c0_0 = arith.constant 0 : index
    %0 = vector.load %arg1[%c0, %c0_0] : memref<32x128xf32, #tpu.memory_space<vmem>>, vector<32x128xf32>
    %c0_1 = arith.constant 0 : index
    %c0_2 = arith.constant 0 : index
    %1 = vector.load %arg2[%c0_1, %c0_2] : memref<32x128xf32, #tpu.memory_space<vmem>>, vector<32x128xf32>
    %2 = arith.mulf %0, %1 : vector<32x128xf32>
    %cst = arith.constant dense<0.000000e+00> : vector<128xf32>
    %3 = vector.multi_reduction <add>, %2, %cst [0] : vector<32x128xf32> to vector<128xf32>
    %4 = vector.shape_cast %3 : vector<128xf32> to vector<1x128xf32>
    %c0_3 = arith.constant 0 : index
    %c0_4 = arith.constant 0 : index
    %5 = vector.load %arg3[%c0_3, %c0_4] : memref<1x128xf32, #tpu.memory_space<vmem>>, vector<1x128xf32>
    %6 = arith.addf %4, %5 : vector<1x128xf32>
    %c0_5 = arith.constant 0 : index
    %c0_6 = arith.constant 0 : index
    %7 = vector.load %arg4[%c0_5, %c0_6] : memref<1x128xf32, #tpu.memory_space<vmem>>, vector<1x128xf32>
    tpu.vector_store %arg4[%c0_5, %c0_6], %6 {strides = array<i32>} : memref<1x128xf32, #tpu.memory_space<vmem>>, vector<1x128xf32>,
    return
  }
  func.func @transform_0(%arg0: i32) -> (i32, i32) {
    %c0_i32 = arith.constant 0 : i32
    %c0_i32_0 = arith.constant 0 : i32
    return %c0_i32, %arg0 : i32, i32
  }
  func.func @transform_1(%arg0: i32) -> (i32, i32) {
    %c0_i32 = arith.constant 0 : i32
    %c0_i32_0 = arith.constant 0 : i32
    return %c0_i32, %arg0 : i32, i32
  }
  func.func @transform_2(%arg0: i32) -> (i32, i32) {
    %c0_i32 = arith.constant 0 : i32
    %c0_i32_0 = arith.constant 0 : i32
    return %c0_i32, %arg0 : i32, i32
  }
  func.func @transform_3(%arg0: i32) -> (i32, i32) {
    %c0_i32 = arith.constant 0 : i32
    %c0_i32_0 = arith.constant 0 : i32
    return %c0_i32, %arg0 : i32, i32
  }
}

</mosaic_0001>

<llo_original>
// kernel: tpu_custom_call.1
$region0: #{tpu_custom_call.1}
  #allocation0 [shape = 'u32[]', space=smem, size = 0x4, offset = 0x4, fixed_abs, tag = 'smem constant byte address 0x4 - core index']
  #allocation1 [shape = 'u32[144,128]{1,0:T(1,128)}', space=vmem, size = 0x12000, scoped, tag = 'internal scratch']
  %s0 = inlined_call_operand.hbm [shape: f32[32,128], index: 0, kind: input, shape index: {}]
  %s1 = inlined_call_operand.hbm [shape: f32[32,128], index: 1, kind: input, shape index: {}]
  %s2 = inlined_call_operand.vmem [shape: f32[1,128], index: 2, kind: input, shape index: {}]
  %s3 = inlined_call_operand.hbm [shape: f32[1,128], index: 3, kind: output, shape index: {}]
  %s4 = sld [smem:[#allocation0]]
  $region30: #{tpu_custom_call.1} parent=0
    _
  %s6 = ssub.s32 1, %s4
  %s7 = scalar_select 0, %s6, %s4
  $region1: #{tpu_custom_call.1} parent=0
    #allocation2 [shape = 'u8[16384]{0}', space=vmem, size = 0x4000, scoped, tag = 'input window, operand 0, single buffered']
    #allocation3 [shape = 's32[1]{0}', space=sflag, size = 0x4, scoped, tag = 'scoped memory for tpu_custom_call.1']
    #allocation4 [shape = 's32[1]{0}', space=sflag, size = 0x4, scoped, tag = 'scoped memory for tpu_custom_call.1']
    #allocation5 [shape = 'u8[16384]{0}', space=vmem, size = 0x4000, scoped, tag = 'input window, operand 1, single buffered']
    #allocation6 [shape = 's32[1]{0}', space=sflag, size = 0x4, scoped, tag = 'scoped memory for tpu_custom_call.1']
    #allocation7 [shape = 'u8[512]{0}', space=vmem, size = 0x400, scoped, tag = 'output window, operand 0, single buffered']
    %8 = vsyncpa [#allocation3], 0
    %9 = vsyncpa [#allocation6], 0
    %10 = vsyncpa [#allocation4], 0
    // Predicated region
    $region2: #{tpu_custom_call.1} parent=1 // pred_check
      _
    $region3: #{tpu_custom_call.1} parent=1 // pred_check_branch
      %12 = sbr.rel (0) target = $region5
    $region4: #{tpu_custom_call.1} parent=1 // pred_region
      %s14 = ssub.s32 512, 512
      %15 = vsyncadd [#allocation3], %s14
      %s16 = sshll.u32 [#allocation2], 4
      %s17 = int_to_ptr.vmem [resolvable:$true] %s16
      %22 = dma.hbm_to_vmem [thread:$0]  %s0, 512, %s17, [#allocation3], 128, 128, 8
    $region5: #{tpu_custom_call.1} parent=1 // pred_fallthru
      _
    // Predicated region
    $region6: #{tpu_custom_call.1} parent=1 // pred_check
      _
    $region7: #{tpu_custom_call.1} parent=1 // pred_check_branch
      %24 = sbr.rel (0) target = $region9
    $region8: #{tpu_custom_call.1} parent=1 // pred_region
      %s26 = ssub.s32 512, 512
      %27 = vsyncadd [#allocation6], %s26
      %s28 = sshll.u32 [#allocation5], 4
      %s29 = int_to_ptr.vmem [resolvable:$true] %s28
      %34 = dma.hbm_to_vmem [thread:$0]  %s1, 512, %s29, [#allocation6], 128, 128, 8
    $region9: #{tpu_custom_call.1} parent=1 // pred_fallthru
      _
    // Predicated region
    $region10: #{tpu_custom_call.1} parent=1 // pred_check
      _
    $region11: #{tpu_custom_call.1} parent=1 // pred_check_branch
      %36 = sbr.rel (0) target = $region13
    $region12: #{tpu_custom_call.1} parent=1 // pred_region
      _
    $region13: #{tpu_custom_call.1} parent=1 // pred_fallthru
      _
    // Predicated region
    $region14: #{tpu_custom_call.1} parent=1 // pred_check
      _
    $region15: #{tpu_custom_call.1} parent=1 // pred_check_branch
      %38 = sbr.rel (0) target = $region17
    $region16: #{tpu_custom_call.1} parent=1 // pred_region
      %39 = dma.done [#allocation3], 512
    $region17: #{tpu_custom_call.1} parent=1 // pred_fallthru
      _
    // Predicated region
    $region18: #{tpu_custom_call.1} parent=1 // pred_check
      _
    $region19: #{tpu_custom_call.1} parent=1 // pred_check_branch
      %41 = sbr.rel (0) target = $region21
    $region20: #{tpu_custom_call.1} parent=1 // pred_region
      %42 = dma.done [#allocation6], 512
    $region21: #{tpu_custom_call.1} parent=1 // pred_fallthru
      _
    %v43 = vld [vmem:[#allocation2] sm:$0xff]
    %v44 = vld [vmem:[#allocation2 + $0x8] sm:$0xff]
    %v45 = vld [vmem:[#allocation2 + $0x10] sm:$0xff]
    %v46 = vld [vmem:[#allocation2 + $0x18] sm:$0xff]
    %v47 = vld [vmem:[#allocation5] sm:$0xff]
    %v48 = vld [vmem:[#allocation5 + $0x8] sm:$0xff]
    %v49 = vld [vmem:[#allocation5 + $0x10] sm:$0xff]
    %v50 = vld [vmem:[#allocation5 + $0x18] sm:$0xff]
    %v51 = vmul.f32 %v43, %v47
    %v52 = vmul.f32 %v44, %v48
    %v53 = vmul.f32 %v45, %v49
    %v54 = vmul.f32 %v46, %v50
    %v55 = vadd.f32 %v51, %v52
    %v56 = vadd.f32 %v55, %v53
    %v57 = vadd.f32 %v56, %v54
    %v58 = vrot.slane %v57, 4
    %v59 = vadd.f32 %v57, %v58
    %v60 = vrot.slane %v59, 2
    %v61 = vadd.f32 %v59, %v60
    %v62 = vrot.slane %v61, 1
    %v63 = vadd.f32 %v61, %v62
    %v64 = vld [vmem:[%s2] sm:$0x1]
    %v65 = vadd.f32 %v63, %v64
    %66 = vst [vmem:[#allocation7] sm:$0x1] %v65
    // Predicated region
    $region22: #{tpu_custom_call.1} parent=1 // pred_check
      _
    $region23: #{tpu_custom_call.1} parent=1 // pred_check_branch
      %68 = sbr.rel (0) target = $region25
    $region24: #{tpu_custom_call.1} parent=1 // pred_region
      %s70 = ssub.s32 16, 16
      %71 = vsyncadd [#allocation4], %s70
      %s73 = sshll.u32 [#allocation7], 4
      %s74 = int_to_ptr.vmem [resolvable:$true] %s73
      %76 = dma.vmem_to_hbm [thread:$0]  %s74, 16, %s3, [#allocation4]
    $region25: #{tpu_custom_call.1} parent=1 // pred_fallthru
      _
    // Predicated region
    $region26: #{tpu_custom_call.1} parent=1 // pred_check
      _
    $region27: #{tpu_custom_call.1} parent=1 // pred_check_branch
      %78 = sbr.rel (0) target = $region29
    $region28: #{tpu_custom_call.1} parent=1 // pred_region
      %79 = dma.done [#allocation4], 16
    $region29: #{tpu_custom_call.1} parent=1 // pred_fallthru
      _
    %80 = vsyncpa [#allocation3], 1
    %81 = vsyncpa [#allocation6], 1
    %82 = vsyncpa [#allocation4], 1

</llo_original>
